<compile_context>
chip_gen: v5e
topology: v5e:2x2
jax: 0.10.0
libtpu: 0.0.40
codegen_flags: <defaults>
</compile_context>

<pallas_src>
import functools

import jax
import jax.numpy as jnp
from jax.experimental import pallas as pl
from jax.experimental.pallas import tpu as pltpu

# Pendulum-v0: observation dim = 3, action dim = 1.
STATE_DIM = 3
ACTION_DIM = 1
H1 = 400
H2 = 300
OUT = 1
LANE = 128  # lane-dense output width


def _round_up(x, m):
    return (x + m - 1) // m * m


def critic_kernel(xu_ref, w1_ref, b1_ref, w2_ref, b2_ref, w3_ref, b3_ref,
                  out_ref, *, d_in):
    """Fused 3-layer MLP on one (TB, .) batch tile. Weights stay VMEM-resident.

    d_in: static number of REAL input features (state_dim + action_dim); only
    those rows of w1 are touched (padded rows are zero and skipped).
    """
    x = xu_ref[...]                       # (TB, Dp)   Dp = 8 (zero-padded K)
    w1 = w1_ref[...]                      # (Dp, H1p)
    tb = x.shape[0]
    h1p = w1.shape[1]

    # ---- layer 1: tiny K -> unrolled VPU broadcast-FMAs over the real rows.
    # Bias broadcast hoisted out of the loop.
    h1 = jnp.broadcast_to(b1_ref[...], (tb, h1p))
    for k in range(d_in):                 # static Python unroll (d_in = 4)
        h1 = h1 + x[:, k:k + 1] * w1[k:k + 1, :]
    h1 = jnp.maximum(h1, 0.0)

    # ---- layer 2: real MXU matmul (TB, 512) @ (512, 384), f32 accumulation.
    h2 = jnp.dot(h1, w2_ref[...], preferred_element_type=jnp.float32) + b2_ref[...]
    h2 = jnp.maximum(h2, 0.0)

    # ---- layer 3: OUT = 1 -> VPU multiply + lane reduction (no 128-wide N pad).
    # Padded H2 lanes are zero in both h2 and the w3 row, so the sum is exact.
    q = jnp.sum(h2 * w3_ref[...], axis=-1, keepdims=True)      # (TB, 1)
    out_ref[...] = q + b3_ref[...]        # broadcast -> (TB, LANE), lane-dense store


def init_critic_params(key, state_dim=STATE_DIM, action_dim=ACTION_DIM):
    """torch.nn.Linear default init: U(-1/sqrt(fan_in), 1/sqrt(fan_in)).
    Weights stored as (in_features, out_features)."""
    dims = [(state_dim + action_dim, H1), (H1, H2), (H2, OUT)]
    params = {}
    for i, (fan_in, fan_out) in enumerate(dims, start=1):
        key, kw, kb = jax.random.split(key, 3)
        bound = 1.0 / jnp.sqrt(jnp.float32(fan_in))
        params[f"w{i}"] = jax.random.uniform(
            kw, (fan_in, fan_out), jnp.float32, -bound, bound)
        params[f"b{i}"] = jax.random.uniform(
            kb, (fan_out,), jnp.float32, -bound, bound)
    return params


def prepare_critic_params(params):
    """Pad parameters to TPU-friendly shapes ONCE (hoisted out of the forward).
    Zero padding is exact: padded input rows / hidden columns contribute 0."""
    d_in = params["w1"].shape[0]
    Dp = _round_up(max(d_in, 8), 8)          # 8: only sublane alignment needed
    H1p = _round_up(H1, 128)                 # 512
    H2p = _round_up(H2, 128)                 # 384

    w1_p = jnp.zeros((Dp, H1p), jnp.float32).at[:d_in, :H1].set(params["w1"])
    b1_p = jnp.zeros((1, H1p), jnp.float32).at[0, :H1].set(params["b1"])
    w2_p = jnp.zeros((H1p, H2p), jnp.float32).at[:H1, :H2].set(params["w2"])
    b2_p = jnp.zeros((1, H2p), jnp.float32).at[0, :H2].set(params["b2"])
    # layer 3 as a single row (used by the in-kernel lane reduction)
    w3_p = jnp.zeros((1, H2p), jnp.float32).at[0, :H2].set(params["w3"][:, 0])
    b3_p = jnp.full((1, LANE), params["b3"][0], jnp.float32)
    return {"w1": w1_p, "b1": b1_p, "w2": w2_p, "b2": b2_p, "w3": w3_p, "b3": b3_p}


@jax.jit
def critic_forward(x, u, p):
    """x: (B, state_dim) f32, u: (B, action_dim) f32, p: prepared params -> (B, 1) f32."""
    B = x.shape[0]
    sd = x.shape[1]
    ad = u.shape[1]
    d_in = sd + ad
    Dp = p["w1"].shape[0]
    H1p = p["w1"].shape[1]
    H2p = p["w2"].shape[1]

    # Batch tiling: single tile for small B, 256-row tiles (MXU-friendly) otherwise.
    Bp = _round_up(max(B, 8), 8)
    if Bp > 256:
        TB = 256
        Bp = _round_up(Bp, TB)
    else:
        TB = Bp
    grid = (Bp // TB,)

    # Build the padded input slab directly (no separate concatenate inside the kernel).
    xu_p = jnp.zeros((Bp, Dp), jnp.float32)
    xu_p = xu_p.at[:B, :sd].set(x.astype(jnp.float32))
    xu_p = xu_p.at[:B, sd:sd + ad].set(u.astype(jnp.float32))

    out_p = pl.pallas_call(
        functools.partial(critic_kernel, d_in=d_in),
        out_shape=jax.ShapeDtypeStruct((Bp, LANE), jnp.float32),
        grid_spec=pltpu.PrefetchScalarGridSpec(
            num_scalar_prefetch=0,
            grid=grid,
            in_specs=[
                pl.BlockSpec((TB, Dp), lambda i: (i, 0)),    # xu tile (pipelined)
                pl.BlockSpec((Dp, H1p), lambda i: (0, 0)),   # w1 (VMEM-resident)
                pl.BlockSpec((1, H1p), lambda i: (0, 0)),    # b1
                pl.BlockSpec((H1p, H2p), lambda i: (0, 0)),  # w2
                pl.BlockSpec((1, H2p), lambda i: (0, 0)),    # b2
                pl.BlockSpec((1, H2p), lambda i: (0, 0)),    # w3 row
                pl.BlockSpec((1, LANE), lambda i: (0, 0)),   # b3 row
            ],
            out_specs=pl.BlockSpec((TB, LANE), lambda i: (i, 0)),
        ),
        compiler_params=pltpu.CompilerParams(
            dimension_semantics=("parallel",)),
    )(xu_p, p["w1"], p["b1"], p["w2"], p["b2"], p["w3"], p["b3"])

    return out_p[:B, :OUT]


def critic_forward_ref(x, u, params):
    """Pure-JAX reference of the PyTorch forward (unpadded params)."""
    h = jnp.concatenate([x, u], axis=1)
    h = jnp.maximum(h @ params["w1"] + params["b1"], 0.0)
    h = jnp.maximum(h @ params["w2"] + params["b2"], 0.0)
    return h @ params["w3"] + params["b3"]


if __name__ == "__main__":
    key = jax.random.PRNGKey(0)
    kp, kx, ku, kx2, ku2 = jax.random.split(key, 5)

    params = init_critic_params(kp)
    prepped = prepare_critic_params(params)   # one-time padding (not per call)

    # Small-batch check (single tile path).
    B = 2
    x = jax.random.normal(kx, (B, STATE_DIM), jnp.float32)
    u = jax.random.normal(ku, (B, ACTION_DIM), jnp.float32)
    q = jax.block_until_ready(critic_forward(x, u, prepped))
    q_ref = critic_forward_ref(x, u, params)
    assert q.shape == (B, 1), q.shape
    assert jnp.allclose(q, q_ref, atol=1e-4, rtol=1e-4), (q, q_ref)

    # Multi-tile check (exercises the batch grid / pipelined path).
    B2 = 260
    x2 = jax.random.normal(kx2, (B2, STATE_DIM), jnp.float32)
    u2 = jax.random.normal(ku2, (B2, ACTION_DIM), jnp.float32)
    q2 = jax.block_until_ready(critic_forward(x2, u2, prepped))
    q2_ref = critic_forward_ref(x2, u2, params)
    assert q2.shape == (B2, 1), q2.shape
    assert jnp.allclose(q2, q2_ref, atol=1e-4, rtol=1e-4)

    print("KERNEL_OK")
</pallas_src>

<mosaic_0001>
module attributes {stable_mosaic.version = 11 : i64} {
  func.func @critic_kernel(%arg0: i32, %arg1: memref<8x8xf32, #tpu.memory_space<vmem>>, %arg2: memref<8x512xf32, #tpu.memory_space<vmem>>, %arg3: memref<1x512xf32, #tpu.memory_space<vmem>>, %arg4: memref<512x384xf32, #tpu.memory_space<vmem>>, %arg5: memref<1x384xf32, #tpu.memory_space<vmem>>, %arg6: memref<1x384xf32, #tpu.memory_space<vmem>>, %arg7: memref<1x128xf32, #tpu.memory_space<vmem>>, %arg8: memref<8x128xf32, #tpu.memory_space<vmem>>) attributes {dimension_semantics = [#tpu.dimension_semantics<parallel>], iteration_bounds = array<i64: 1>, scalar_prefetch = 0 : i64, scratch_operands = 0 : i64, tpu.core_type = #tpu.core_type<tc>, window_params = [{transform_indices = @transform_0, window_bounds = array<i64: 8, 8>}, {pipeline_mode = #tpu.pipeline_mode<synchronous>, transform_indices = @transform_1, window_bounds = array<i64: 8, 512>}, {pipeline_mode = #tpu.pipeline_mode<synchronous>, transform_indices = @transform_2, window_bounds = array<i64: 1, 512>}, {pipeline_mode = #tpu.pipeline_mode<synchronous>, transform_indices = @transform_3, window_bounds = array<i64: 512, 384>}, {pipeline_mode = #tpu.pipeline_mode<synchronous>, transform_indices = @transform_4, window_bounds = array<i64: 1, 384>}, {pipeline_mode = #tpu.pipeline_mode<synchronous>, transform_indices = @transform_5, window_bounds = array<i64: 1, 384>}, {pipeline_mode = #tpu.pipeline_mode<synchronous>, transform_indices = @transform_6, window_bounds = array<i64: 1, 128>}, {transform_indices = @transform_7, window_bounds = array<i64: 8, 128>}]} {
    %c0 = arith.constant 0 : index
    %c0_0 = arith.constant 0 : index
    %0 = vector.load %arg1[%c0, %c0_0] : memref<8x8xf32, #tpu.memory_space<vmem>>, vector<8x8xf32>
    %c0_1 = arith.constant 0 : index
    %c0_2 = arith.constant 0 : index
    %1 = vector.load %arg2[%c0_1, %c0_2] : memref<8x512xf32, #tpu.memory_space<vmem>>, vector<8x512xf32>
    %c0_3 = arith.constant 0 : index
    %c0_4 = arith.constant 0 : index
    %2 = vector.load %arg3[%c0_3, %c0_4] : memref<1x512xf32, #tpu.memory_space<vmem>>, vector<1x512xf32>
    %3 = vector.shape_cast %2 : vector<1x512xf32> to vector<1x512xf32>
    %4 = vector.broadcast %3 : vector<1x512xf32> to vector<8x512xf32>
    %5 = vector.extract_strided_slice %0 {offsets = [0, 0], sizes = [8, 1], strides = [1, 1]} : vector<8x8xf32> to vector<8x1xf32>
    %6 = vector.extract_strided_slice %1 {offsets = [0, 0], sizes = [1, 512], strides = [1, 1]} : vector<8x512xf32> to vector<1x512xf32>
    %7 = vector.broadcast %5 : vector<8x1xf32> to vector<8x512xf32>
    %8 = vector.broadcast %6 : vector<1x512xf32> to vector<8x512xf32>
    %9 = arith.mulf %7, %8 : vector<8x512xf32>
    %10 = arith.addf %4, %9 : vector<8x512xf32>
    %11 = vector.extract_strided_slice %0 {offsets = [0, 1], sizes = [8, 1], strides = [1, 1]} : vector<8x8xf32> to vector<8x1xf32>
    %12 = vector.extract_strided_slice %1 {offsets = [1, 0], sizes = [1, 512], strides = [1, 1]} : vector<8x512xf32> to vector<1x512xf32>
    %13 = vector.broadcast %11 : vector<8x1xf32> to vector<8x512xf32>
    %14 = vector.broadcast %12 : vector<1x512xf32> to vector<8x512xf32>
    %15 = arith.mulf %13, %14 : vector<8x512xf32>
    %16 = arith.addf %10, %15 : vector<8x512xf32>
    %17 = vector.extract_strided_slice %0 {offsets = [0, 2], sizes = [8, 1], strides = [1, 1]} : vector<8x8xf32> to vector<8x1xf32>
    %18 = vector.extract_strided_slice %1 {offsets = [2, 0], sizes = [1, 512], strides = [1, 1]} : vector<8x512xf32> to vector<1x512xf32>
    %19 = vector.broadcast %17 : vector<8x1xf32> to vector<8x512xf32>
    %20 = vector.broadcast %18 : vector<1x512xf32> to vector<8x512xf32>
    %21 = arith.mulf %19, %20 : vector<8x512xf32>
    %22 = arith.addf %16, %21 : vector<8x512xf32>
    %23 = vector.extract_strided_slice %0 {offsets = [0, 3], sizes = [8, 1], strides = [1, 1]} : vector<8x8xf32> to vector<8x1xf32>
    %24 = vector.extract_strided_slice %1 {offsets = [3, 0], sizes = [1, 512], strides = [1, 1]} : vector<8x512xf32> to vector<1x512xf32>
    %25 = vector.broadcast %23 : vector<8x1xf32> to vector<8x512xf32>
    %26 = vector.broadcast %24 : vector<1x512xf32> to vector<8x512xf32>
    %27 = arith.mulf %25, %26 : vector<8x512xf32>
    %28 = arith.addf %22, %27 : vector<8x512xf32>
    %cst = arith.constant 0.000000e+00 : f32
    %29 = vector.broadcast %cst : f32 to vector<8x512xf32>
    %30 = arith.maximumf %28, %29 : vector<8x512xf32>
    %c0_5 = arith.constant 0 : index
    %c0_6 = arith.constant 0 : index
    %31 = vector.load %arg4[%c0_5, %c0_6] : memref<512x384xf32, #tpu.memory_space<vmem>>, vector<512x384xf32>
    %cst_7 = arith.constant dense<0.000000e+00> : vector<8x384xf32>
    %32 = tpu.matmul %30, %31, %cst_7 {dimension_numbers = #tpu.dot_dimension_numbers<[1], [0], [0], [1], [0, 0, 1, 1], [], []>} : vector<8x512xf32>, vector<512x384xf32>, vector<8x384xf32> -> vector<8x384xf32>
    %c0_8 = arith.constant 0 : index
    %c0_9 = arith.constant 0 : index
    %33 = vector.load %arg5[%c0_8, %c0_9] : memref<1x384xf32, #tpu.memory_space<vmem>>, vector<1x384xf32>
    %34 = vector.broadcast %33 : vector<1x384xf32> to vector<8x384xf32>
    %35 = arith.addf %32, %34 : vector<8x384xf32>
    %cst_10 = arith.constant 0.000000e+00 : f32
    %36 = vector.broadcast %cst_10 : f32 to vector<8x384xf32>
    %37 = arith.maximumf %35, %36 : vector<8x384xf32>
    %c0_11 = arith.constant 0 : index
    %c0_12 = arith.constant 0 : index
    %38 = vector.load %arg6[%c0_11, %c0_12] : memref<1x384xf32, #tpu.memory_space<vmem>>, vector<1x384xf32>
    %39 = vector.broadcast %38 : vector<1x384xf32> to vector<8x384xf32>
    %40 = arith.mulf %37, %39 : vector<8x384xf32>
    %cst_13 = arith.constant dense<0.000000e+00> : vector<8xf32>
    %41 = vector.multi_reduction <add>, %40, %cst_13 [1] : vector<8x384xf32> to vector<8xf32>
    %42 = vector.shape_cast %41 : vector<8xf32> to vector<8x1xf32>
    %c0_14 = arith.constant 0 : index
    %c0_15 = arith.constant 0 : index
    %43 = vector.load %arg7[%c0_14, %c0_15] : memref<1x128xf32, #tpu.memory_space<vmem>>, vector<1x128xf32>
    %44 = vector.broadcast %42 : vector<8x1xf32> to vector<8x128xf32>
    %45 = vector.broadcast %43 : vector<1x128xf32> to vector<8x128xf32>
    %46 = arith.addf %44, %45 : vector<8x128xf32>
    %c0_16 = arith.constant 0 : index
    %c0_17 = arith.constant 0 : index
    %47 = vector.load %arg8[%c0_16, %c0_17] : memref<8x128xf32, #tpu.memory_space<vmem>>, vector<8x128xf32>
    tpu.vector_store %arg8[%c0_16, %c0_17], %46 {strides = array<i32>} : memref<8x128xf32, #tpu.memory_space<vmem>>, vector<8x128xf32>,
    return
  }
  func.func @transform_0(%arg0: i32) -> (i32, i32) {
    %c0_i32 = arith.constant 0 : i32
    %c0_i32_0 = arith.constant 0 : i32
    return %arg0, %c0_i32 : i32, i32
  }
  func.func @transform_1(%arg0: i32) -> (i32, i32) {
    %c0_i32 = arith.constant 0 : i32
    %c0_i32_0 = arith.constant 0 : i32
    %c0_i32_1 = arith.constant 0 : i32
    return %c0_i32, %c0_i32_0 : i32, i32
  }
  func.func @transform_2(%arg0: i32) -> (i32, i32) {
    %c0_i32 = arith.constant 0 : i32
    %c0_i32_0 = arith.constant 0 : i32
    %c0_i32_1 = arith.constant 0 : i32
    return %c0_i32, %c0_i32_0 : i32, i32
  }
  func.func @transform_3(%arg0: i32) -> (i32, i32) {
    %c0_i32 = arith.constant 0 : i32
    %c0_i32_0 = arith.constant 0 : i32
    %c0_i32_1 = arith.constant 0 : i32
    return %c0_i32, %c0_i32_0 : i32, i32
  }
  func.func @transform_4(%arg0: i32) -> (i32, i32) {
    %c0_i32 = arith.constant 0 : i32
    %c0_i32_0 = arith.constant 0 : i32
    %c0_i32_1 = arith.constant 0 : i32
    return %c0_i32, %c0_i32_0 : i32, i32
  }
  func.func @transform_5(%arg0: i32) -> (i32, i32) {
    %c0_i32 = arith.constant 0 : i32
    %c0_i32_0 = arith.constant 0 : i32
    %c0_i32_1 = arith.constant 0 : i32
    return %c0_i32, %c0_i32_0 : i32, i32
  }
  func.func @transform_6(%arg0: i32) -> (i32, i32) {
    %c0_i32 = arith.constant 0 : i32
    %c0_i32_0 = arith.constant 0 : i32
    %c0_i32_1 = arith.constant 0 : i32
    return %c0_i32, %c0_i32_0 : i32, i32
  }
  func.func @transform_7(%arg0: i32) -> (i32, i32) {
    %c0_i32 = arith.constant 0 : i32
    %c0_i32_0 = arith.constant 0 : i32
    return %arg0, %c0_i32 : i32, i32
  }
}

</mosaic_0001>

<llo_original>
// kernel: critic_forward.1
$region0: #{critic_forward.1}
  #allocation0 [shape = 'u32[]', space=smem, size = 0x4, offset = 0x4, fixed_abs, tag = 'smem constant byte address 0x4 - core index']
  #allocation1 [shape = 'u32[72,128]{1,0:T(1,128)}', space=vmem, size = 0x9000, scoped, tag = 'internal scratch']
  %s0 = inlined_call_operand.vmem [shape: f32[8,8], index: 0, kind: input, shape index: {}]
  %s1 = inlined_call_operand.hbm [shape: f32[8,512], index: 1, kind: input, shape index: {}]
  %s2 = inlined_call_operand.vmem [shape: f32[1,512], index: 2, kind: input, shape index: {}]
  %s3 = inlined_call_operand.hbm [shape: f32[512,384], index: 3, kind: input, shape index: {}]
  %s4 = inlined_call_operand.vmem [shape: f32[1,384], index: 4, kind: input, shape index: {}]
  %s5 = inlined_call_operand.vmem [shape: f32[1,384], index: 5, kind: input, shape index: {}]
  %s6 = inlined_call_operand.vmem [shape: f32[1,128], index: 6, kind: input, shape index: {}]
  %s7 = inlined_call_operand.vmem [shape: f32[8,128], index: 7, kind: output, shape index: {}]
  %s8 = sld [smem:[#allocation0]]
  $region46: #{critic_forward.1} parent=0
    _
  %s10 = ssub.s32 1, %s8
  %s11 = scalar_select 0, %s10, %s8
  $region1: #{critic_forward.1} parent=0
    #allocation2 [shape = 'u8[16384]{0}', space=vmem, size = 0x4000, scoped, tag = 'input window, operand 1, single buffered']
    #allocation3 [shape = 's32[1]{0}', space=sflag, size = 0x4, scoped, tag = 'scoped memory for critic_forward.1']
    #allocation4 [shape = 'u8[786432]{0}', space=vmem, size = 0xc0000, scoped, tag = 'input window, operand 3, single buffered']
    #allocation5 [shape = 's32[1]{0}', space=sflag, size = 0x4, scoped, tag = 'scoped memory for critic_forward.1']
    %12 = vsyncpa [#allocation3], 0
    %13 = vsyncpa [#allocation5], 0
    // Predicated region
    $region2: #{critic_forward.1} parent=1 // pred_check
      _
    $region3: #{critic_forward.1} parent=1 // pred_check_branch
      %15 = sbr.rel (0) target = $region5
    $region4: #{critic_forward.1} parent=1 // pred_region
      _
    $region5: #{critic_forward.1} parent=1 // pred_fallthru
      _
    // Predicated region
    $region6: #{critic_forward.1} parent=1 // pred_check
      _
    $region7: #{critic_forward.1} parent=1 // pred_check_branch
      %17 = sbr.rel (0) target = $region9
    $region8: #{critic_forward.1} parent=1 // pred_region
      %19 = vsyncadd [#allocation3], 0
      %s21 = sshll.u32 %s1, 4
      %s22 = int_to_ptr.hbm [resolvable:$true] %s21
      %s23 = sshll.u32 [#allocation2], 4
      %s24 = int_to_ptr.vmem [resolvable:$true] %s23
      %26 = dma.hbm_to_vmem [thread:$0]  %s22, 512, %s24, [#allocation3]
    $region9: #{critic_forward.1} parent=1 // pred_fallthru
      _
    // Predicated region
    $region10: #{critic_forward.1} parent=1 // pred_check
      _
    $region11: #{critic_forward.1} parent=1 // pred_check_branch
      %28 = sbr.rel (0) target = $region13
    $region12: #{critic_forward.1} parent=1 // pred_region
      _
    $region13: #{critic_forward.1} parent=1 // pred_fallthru
      _
    // Predicated region
    $region14: #{critic_forward.1} parent=1 // pred_check
      _
    $region15: #{critic_forward.1} parent=1 // pred_check_branch
      %30 = sbr.rel (0) target = $region17
    $region16: #{critic_forward.1} parent=1 // pred_region
      %32 = vsyncadd [#allocation5], 0
      %s33 = sshll.u32 %s3, 4
      %s34 = int_to_ptr.hbm [resolvable:$true] %s33
      %s35 = sshll.u32 [#allocation4], 4
      %s36 = int_to_ptr.vmem [resolvable:$true] %s35
      %41 = dma.hbm_to_vmem [thread:$0]  %s34, 24576, %s36, [#allocation5], 384, 384, 24
    $region17: #{critic_forward.1} parent=1 // pred_fallthru
      _
    // Predicated region
    $region18: #{critic_forward.1} parent=1 // pred_check
      _
    $region19: #{critic_forward.1} parent=1 // pred_check_branch
      %43 = sbr.rel (0) target = $region21
    $region20: #{critic_forward.1} parent=1 // pred_region
      _
    $region21: #{critic_forward.1} parent=1 // pred_fallthru
      _
    // Predicated region
    $region22: #{critic_forward.1} parent=1 // pred_check
      _
    $region23: #{critic_forward.1} parent=1 // pred_check_branch
      %45 = sbr.rel (0) target = $region25
    $region24: #{critic_forward.1} parent=1 // pred_region
      _
    $region25: #{critic_forward.1} parent=1 // pred_fallthru
      _
    // Predicated region
    $region26: #{critic_forward.1} parent=1 // pred_check
      _
    $region27: #{critic_forward.1} parent=1 // pred_check_branch
      %47 = sbr.rel (0) target = $region29
    $region28: #{critic_forward.1} parent=1 // pred_region
      _
    $region29: #{critic_forward.1} parent=1 // pred_fallthru
      _
    // Predicated region
    $region30: #{critic_forward.1} parent=1 // pred_check
      _
    $region31: #{critic_forward.1} parent=1 // pred_check_branch
      %49 = sbr.rel (0) target = $region33
    $region32: #{critic_forward.1} parent=1 // pred_region
      %51 = dma.done [#allocation3], 512
    $region33: #{critic_forward.1} parent=1 // pred_fallthru
      _
    // Predicated region
    $region34: #{critic_forward.1} parent=1 // pred_check
      _
    $region35: #{critic_forward.1} parent=1 // pred_check_branch
      %53 = sbr.rel (0) target = $region37
    $region36: #{critic_forward.1} parent=1 // pred_region
      %55 = dma.done [#allocation5], 24576
    $region37: #{critic_forward.1} parent=1 // pred_fallthru
      _
    %v56 = vld [vmem:[%s0] sm:$0xff]
    %v57 = vld [vmem:[#allocation2] sm:$0xff]
    %v58 = vld [vmem:[#allocation2 + $0x8] sm:$0xff]
    %v59 = vld [vmem:[#allocation2 + $0x10] sm:$0xff]
    %v60 = vld [vmem:[#allocation2 + $0x18] sm:$0xff]
    %v61 = vld [vmem:[%s2] sm:$0xf]
    %v63 = vperm.slane %v61, 0
    %v64 = vperm.slane %v61, 1
    %v65 = vperm.slane %v61, 2
    %v66 = vperm.slane %v61, 3
    %72 = vset.pattern.permute.xlu0 0
    %73 = vperm.xlu0 %72, %v56
    %v74 = vpop.permute.xlu0 %73
    %v76 = vperm.slane %v57, 0
    %v77 = vperm.slane %v58, 0
    %v78 = vperm.slane %v59, 0
    %v79 = vperm.slane %v60, 0
    %v80 = vmul.f32 %v74, %v76
    %v81 = vmul.f32 %v74, %v77
    %v82 = vmul.f32 %v74, %v78
    %v83 = vmul.f32 %v74, %v79
    %v84 = vadd.f32 %v63, %v80
    %v85 = vadd.f32 %v64, %v81
    %v86 = vadd.f32 %v65, %v82
    %v87 = vadd.f32 %v66, %v83
    %88 = vset.pattern.permute.xlu0 1
    %89 = vperm.xlu0 %88, %v56
    %v90 = vpop.permute.xlu0 %89
    %v92 = vperm.slane %v57, 1
    %v93 = vperm.slane %v58, 1
    %v94 = vperm.slane %v59, 1
    %v95 = vperm.slane %v60, 1
    %v96 = vmul.f32 %v90, %v92
    %v97 = vmul.f32 %v90, %v93
    %v98 = vmul.f32 %v90, %v94
    %v99 = vmul.f32 %v90, %v95
    %v100 = vadd.f32 %v84, %v96
    %v101 = vadd.f32 %v85, %v97
    %v102 = vadd.f32 %v86, %v98
    %v103 = vadd.f32 %v87, %v99
    %104 = vset.pattern.permute.xlu0 2
    %105 = vperm.xlu0 %104, %v56
    %v106 = vpop.permute.xlu0 %105
    %v108 = vperm.slane %v57, 2
    %v109 = vperm.slane %v58, 2
    %v110 = vperm.slane %v59, 2
    %v111 = vperm.slane %v60, 2
    %v112 = vmul.f32 %v106, %v108
    %v113 = vmul.f32 %v106, %v109
    %v114 = vmul.f32 %v106, %v110
    %v115 = vmul.f32 %v106, %v111
    %v116 = vadd.f32 %v100, %v112
    %v117 = vadd.f32 %v101, %v113
    %v118 = vadd.f32 %v102, %v114
    %v119 = vadd.f32 %v103, %v115
    %120 = vset.pattern.permute.xlu0 3
    %121 = vperm.xlu0 %120, %v56
    %v122 = vpop.permute.xlu0 %121
    %v124 = vperm.slane %v57, 3
    %v125 = vperm.slane %v58, 3
    %v126 = vperm.slane %v59, 3
    %v127 = vperm.slane %v60, 3
    %v128 = vmul.f32 %v122, %v124
    %v129 = vmul.f32 %v122, %v125
    %v130 = vmul.f32 %v122, %v126
    %v131 = vmul.f32 %v122, %v127
    %v132 = vadd.f32 %v116, %v128
    %v133 = vadd.f32 %v117, %v129
    %v134 = vadd.f32 %v118, %v130
    %v135 = vadd.f32 %v119, %v131
    %v136 = vmax.f32 %v132, 0.0
    %v137 = vmax.f32 %v133, 0.0
    %v138 = vmax.f32 %v134, 0.0
    %v139 = vmax.f32 %v135, 0.0
    %v140 = vld [vmem:[#allocation4] sm:$0xff]
    %v141 = vld [vmem:[#allocation4 + $0x8] sm:$0xff]
    %v142 = vld [vmem:[#allocation4 + $0x10] sm:$0xff]
    %v143 = vld [vmem:[#allocation4 + $0x18] sm:$0xff]
    %v144 = vld [vmem:[#allocation4 + $0x20] sm:$0xff]
    %v145 = vld [vmem:[#allocation4 + $0x28] sm:$0xff]
    %v146 = vld [vmem:[#allocation4 + $0x30] sm:$0xff]
    %v147 = vld [vmem:[#allocation4 + $0x38] sm:$0xff]
    %v148 = vld [vmem:[#allocation4 + $0x40] sm:$0xff]
    %v149 = vld [vmem:[#allocation4 + $0x48] sm:$0xff]
    %v150 = vld [vmem:[#allocation4 + $0x50] sm:$0xff]
    %v151 = vld [vmem:[#allocation4 + $0x58] sm:$0xff]
    %v152 = vld [vmem:[#allocation4 + $0x60] sm:$0xff]
    %v153 = vld [vmem:[#allocation4 + $0x68] sm:$0xff]
    %v154 = vld [vmem:[#allocation4 + $0x70] sm:$0xff]
    %v155 = vld [vmem:[#allocation4 + $0x78] sm:$0xff]
    %v156 = vld [vmem:[#allocation4 + $0x80] sm:$0xff]
    %v157 = vld [vmem:[#allocation4 + $0x88] sm:$0xff]
    %v158 = vld [vmem:[#allocation4 + $0x90] sm:$0xff]
    %v159 = vld [vmem:[#allocation4 + $0x98] sm:$0xff]
    %v160 = vld [vmem:[#allocation4 + $0xa0] sm:$0xff]
    %v161 = vld [vmem:[#allocation4 + $0xa8] sm:$0xff]
    %v162 = vld [vmem:[#allocation4 + $0xb0] sm:$0xff]
    %v163 = vld [vmem:[#allocation4 + $0xb8] sm:$0xff]
    %v164 = vld [vmem:[#allocation4 + $0xc0] sm:$0xff]
    %v165 = vld [vmem:[#allocation4 + $0xc8] sm:$0xff]
    %v166 = vld [vmem:[#allocation4 + $0xd0] sm:$0xff]
    %v167 = vld [vmem:[#allocation4 + $0xd8] sm:$0xff]
    %v168 = vld [vmem:[#allocation4 + $0xe0] sm:$0xff]
    %v169 = vld [vmem:[#allocation4 + $0xe8] sm:$0xff]
    %v170 = vld [vmem:[#allocation4 + $0xf0] sm:$0xff]
    %v171 = vld [vmem:[#allocation4 + $0xf8] sm:$0xff]
    %v172 = vld [vmem:[#allocation4 + $0x100] sm:$0xff]
    %v173 = vld [vmem:[#allocation4 + $0x108] sm:$0xff]
    %v174 = vld [vmem:[#allocation4 + $0x110] sm:$0xff]
    %v175 = vld [vmem:[#allocation4 + $0x118] sm:$0xff]
    %v176 = vld [vmem:[#allocation4 + $0x120] sm:$0xff]
    %v177 = vld [vmem:[#allocation4 + $0x128] sm:$0xff]
    %v178 = vld [vmem:[#allocation4 + $0x130] sm:$0xff]
    %v179 = vld [vmem:[#allocation4 + $0x138] sm:$0xff]
    %v180 = vld [vmem:[#allocation4 + $0x140] sm:$0xff]
    %v181 = vld [vmem:[#allocation4 + $0x148] sm:$0xff]
    %v182 = vld [vmem:[#allocation4 + $0x150] sm:$0xff]
    %v183 = vld [vmem:[#allocation4 + $0x158] sm:$0xff]
    %v184 = vld [vmem:[#allocation4 + $0x160] sm:$0xff]
    %v185 = vld [vmem:[#allocation4 + $0x168] sm:$0xff]
    %v186 = vld [vmem:[#allocation4 + $0x170] sm:$0xff]
    %v187 = vld [vmem:[#allocation4 + $0x178] sm:$0xff]
    %v188 = vld [vmem:[#allocation4 + $0x180] sm:$0xff]
    %v189 = vld [vmem:[#allocation4 + $0x188] sm:$0xff]
    %v190 = vld [vmem:[#allocation4 + $0x190] sm:$0xff]
    %v191 = vld [vmem:[#allocation4 + $0x198] sm:$0xff]
    %v192 = vld [vmem:[#allocation4 + $0x1a0] sm:$0xff]
    %v193 = vld [vmem:[#allocation4 + $0x1a8] sm:$0xff]
    %v194 = vld [vmem:[#allocation4 + $0x1b0] sm:$0xff]
    %v195 = vld [vmem:[#allocation4 + $0x1b8] sm:$0xff]
    %v196 = vld [vmem:[#allocation4 + $0x1c0] sm:$0xff]
    %v197 = vld [vmem:[#allocation4 + $0x1c8] sm:$0xff]
    %v198 = vld [vmem:[#allocation4 + $0x1d0] sm:$0xff]
    %v199 = vld [vmem:[#allocation4 + $0x1d8] sm:$0xff]
    %v200 = vld [vmem:[#allocation4 + $0x1e0] sm:$0xff]
    %v201 = vld [vmem:[#allocation4 + $0x1e8] sm:$0xff]
    %v202 = vld [vmem:[#allocation4 + $0x1f0] sm:$0xff]
    %v203 = vld [vmem:[#allocation4 + $0x1f8] sm:$0xff]
    %v204 = vld [vmem:[#allocation4 + $0x200] sm:$0xff]
    %v205 = vld [vmem:[#allocation4 + $0x208] sm:$0xff]
    %v206 = vld [vmem:[#allocation4 + $0x210] sm:$0xff]
    %v207 = vld [vmem:[#allocation4 + $0x218] sm:$0xff]
    %v208 = vld [vmem:[#allocation4 + $0x220] sm:$0xff]
    %v209 = vld [vmem:[#allocation4 + $0x228] sm:$0xff]
    %v210 = vld [vmem:[#allocation4 + $0x230] sm:$0xff]
    %v211 = vld [vmem:[#allocation4 + $0x238] sm:$0xff]
    %v212 = vld [vmem:[#allocation4 + $0x240] sm:$0xff]
    %v213 = vld [vmem:[#allocation4 + $0x248] sm:$0xff]
    %v214 = vld [vmem:[#allocation4 + $0x250] sm:$0xff]
    %v215 = vld [vmem:[#allocation4 + $0x258] sm:$0xff]
    %v216 = vld [vmem:[#allocation4 + $0x260] sm:$0xff]
    %v217 = vld [vmem:[#allocation4 + $0x268] sm:$0xff]
    %v218 = vld [vmem:[#allocation4 + $0x270] sm:$0xff]
    %v219 = vld [vmem:[#allocation4 + $0x278] sm:$0xff]
    %v220 = vld [vmem:[#allocation4 + $0x280] sm:$0xff]
    %v221 = vld [vmem:[#allocation4 + $0x288] sm:$0xff]
    %v222 = vld [vmem:[#allocation4 + $0x290] sm:$0xff]
    %v223 = vld [vmem:[#allocation4 + $0x298] sm:$0xff]
    %v224 = vld [vmem:[#allocation4 + $0x2a0] sm:$0xff]
    %v225 = vld [vmem:[#allocation4 + $0x2a8] sm:$0xff]
    %v226 = vld [vmem:[#allocation4 + $0x2b0] sm:$0xff]
    %v227 = vld [vmem:[#allocation4 + $0x2b8] sm:$0xff]
    %v228 = vld [vmem:[#allocation4 + $0x2c0] sm:$0xff]
    %v229 = vld [vmem:[#allocation4 + $0x2c8] sm:$0xff]
    %v230 = vld [vmem:[#allocation4 + $0x2d0] sm:$0xff]
    %v231 = vld [vmem:[#allocation4 + $0x2d8] sm:$0xff]
    %v232 = vld [vmem:[#allocation4 + $0x2e0] sm:$0xff]
    %v233 = vld [vmem:[#allocation4 + $0x2e8] sm:$0xff]
    %v234 = vld [vmem:[#allocation4 + $0x2f0] sm:$0xff]
    %v235 = vld [vmem:[#allocation4 + $0x2f8] sm:$0xff]
    %v236 = vld [vmem:[#allocation4 + $0x300] sm:$0xff]
    %v237 = vld [vmem:[#allocation4 + $0x308] sm:$0xff]
    %v238 = vld [vmem:[#allocation4 + $0x310] sm:$0xff]
    %v239 = vld [vmem:[#allocation4 + $0x318] sm:$0xff]
    %v240 = vld [vmem:[#allocation4 + $0x320] sm:$0xff]
    %v241 = vld [vmem:[#allocation4 + $0x328] sm:$0xff]
    %v242 = vld [vmem:[#allocation4 + $0x330] sm:$0xff]
    %v243 = vld [vmem:[#allocation4 + $0x338] sm:$0xff]
    %v244 = vld [vmem:[#allocation4 + $0x340] sm:$0xff]
    %v245 = vld [vmem:[#allocation4 + $0x348] sm:$0xff]
    %v246 = vld [vmem:[#allocation4 + $0x350] sm:$0xff]
    %v247 = vld [vmem:[#allocation4 + $0x358] sm:$0xff]
    %v248 = vld [vmem:[#allocation4 + $0x360] sm:$0xff]
    %v249 = vld [vmem:[#allocation4 + $0x368] sm:$0xff]
    %v250 = vld [vmem:[#allocation4 + $0x370] sm:$0xff]
    %v251 = vld [vmem:[#allocation4 + $0x378] sm:$0xff]
    %v252 = vld [vmem:[#allocation4 + $0x380] sm:$0xff]
    %v253 = vld [vmem:[#allocation4 + $0x388] sm:$0xff]
    %v254 = vld [vmem:[#allocation4 + $0x390] sm:$0xff]
    %v255 = vld [vmem:[#allocation4 + $0x398] sm:$0xff]
    %v256 = vld [vmem:[#allocation4 + $0x3a0] sm:$0xff]
    %v257 = vld [vmem:[#allocation4 + $0x3a8] sm:$0xff]
    %v258 = vld [vmem:[#allocation4 + $0x3b0] sm:$0xff]
    %v259 = vld [vmem:[#allocation4 + $0x3b8] sm:$0xff]
    %v260 = vld [vmem:[#allocation4 + $0x3c0] sm:$0xff]
    %v261 = vld [vmem:[#allocation4 + $0x3c8] sm:$0xff]
    %v262 = vld [vmem:[#allocation4 + $0x3d0] sm:$0xff]
    %v263 = vld [vmem:[#allocation4 + $0x3d8] sm:$0xff]
    %v264 = vld [vmem:[#allocation4 + $0x3e0] sm:$0xff]
    %v265 = vld [vmem:[#allocation4 + $0x3e8] sm:$0xff]
    %v266 = vld [vmem:[#allocation4 + $0x3f0] sm:$0xff]
    %v267 = vld [vmem:[#allocation4 + $0x3f8] sm:$0xff]
    %v268 = vld [vmem:[#allocation4 + $0x400] sm:$0xff]
    %v269 = vld [vmem:[#allocation4 + $0x408] sm:$0xff]
    %v270 = vld [vmem:[#allocation4 + $0x410] sm:$0xff]
    %v271 = vld [vmem:[#allocation4 + $0x418] sm:$0xff]
    %v272 = vld [vmem:[#allocation4 + $0x420] sm:$0xff]
    %v273 = vld [vmem:[#allocation4 + $0x428] sm:$0xff]
    %v274 = vld [vmem:[#allocation4 + $0x430] sm:$0xff]
    %v275 = vld [vmem:[#allocation4 + $0x438] sm:$0xff]
    %v276 = vld [vmem:[#allocation4 + $0x440] sm:$0xff]
    %v277 = vld [vmem:[#allocation4 + $0x448] sm:$0xff]
    %v278 = vld [vmem:[#allocation4 + $0x450] sm:$0xff]
    %v279 = vld [vmem:[#allocation4 + $0x458] sm:$0xff]
    %v280 = vld [vmem:[#allocation4 + $0x460] sm:$0xff]
    %v281 = vld [vmem:[#allocation4 + $0x468] sm:$0xff]
    %v282 = vld [vmem:[#allocation4 + $0x470] sm:$0xff]
    %v283 = vld [vmem:[#allocation4 + $0x478] sm:$0xff]
    %v284 = vld [vmem:[#allocation4 + $0x480] sm:$0xff]
    %v285 = vld [vmem:[#allocation4 + $0x488] sm:$0xff]
    %v286 = vld [vmem:[#allocation4 + $0x490] sm:$0xff]
    %v287 = vld [vmem:[#allocation4 + $0x498] sm:$0xff]
    %v288 = vld [vmem:[#allocation4 + $0x4a0] sm:$0xff]
    %v289 = vld [vmem:[#allocation4 + $0x4a8] sm:$0xff]
    %v290 = vld [vmem:[#allocation4 + $0x4b0] sm:$0xff]
    %v291 = vld [vmem:[#allocation4 + $0x4b8] sm:$0xff]
    %v292 = vld [vmem:[#allocation4 + $0x4c0] sm:$0xff]
    %v293 = vld [vmem:[#allocation4 + $0x4c8] sm:$0xff]
    %v294 = vld [vmem:[#allocation4 + $0x4d0] sm:$0xff]
    %v295 = vld [vmem:[#allocation4 + $0x4d8] sm:$0xff]
    %v296 = vld [vmem:[#allocation4 + $0x4e0] sm:$0xff]
    %v297 = vld [vmem:[#allocation4 + $0x4e8] sm:$0xff]
    %v298 = vld [vmem:[#allocation4 + $0x4f0] sm:$0xff]
    %v299 = vld [vmem:[#allocation4 + $0x4f8] sm:$0xff]
    %v300 = vld [vmem:[#allocation4 + $0x500] sm:$0xff]
    %v301 = vld [vmem:[#allocation4 + $0x508] sm:$0xff]
    %v302 = vld [vmem:[#allocation4 + $0x510] sm:$0xff]
    %v303 = vld [vmem:[#allocation4 + $0x518] sm:$0xff]
    %v304 = vld [vmem:[#allocation4 + $0x520] sm:$0xff]
    %v305 = vld [vmem:[#allocation4 + $0x528] sm:$0xff]
    %v306 = vld [vmem:[#allocation4 + $0x530] sm:$0xff]
    %v307 = vld [vmem:[#allocation4 + $0x538] sm:$0xff]
    %v308 = vld [vmem:[#allocation4 + $0x540] sm:$0xff]
    %v309 = vld [vmem:[#allocation4 + $0x548] sm:$0xff]
    %v310 = vld [vmem:[#allocation4 + $0x550] sm:$0xff]
    %v311 = vld [vmem:[#allocation4 + $0x558] sm:$0xff]
    %v312 = vld [vmem:[#allocation4 + $0x560] sm:$0xff]
    %v313 = vld [vmem:[#allocation4 + $0x568] sm:$0xff]
    %v314 = vld [vmem:[#allocation4 + $0x570] sm:$0xff]
    %v315 = vld [vmem:[#allocation4 + $0x578] sm:$0xff]
    %v316 = vld [vmem:[#allocation4 + $0x580] sm:$0xff]
    %v317 = vld [vmem:[#allocation4 + $0x588] sm:$0xff]
    %v318 = vld [vmem:[#allocation4 + $0x590] sm:$0xff]
    %v319 = vld [vmem:[#allocation4 + $0x598] sm:$0xff]
    %v320 = vld [vmem:[#allocation4 + $0x5a0] sm:$0xff]
    %v321 = vld [vmem:[#allocation4 + $0x5a8] sm:$0xff]
    %v322 = vld [vmem:[#allocation4 + $0x5b0] sm:$0xff]
    %v323 = vld [vmem:[#allocation4 + $0x5b8] sm:$0xff]
    %v324 = vld [vmem:[#allocation4 + $0x5c0] sm:$0xff]
    %v325 = vld [vmem:[#allocation4 + $0x5c8] sm:$0xff]
    %v326 = vld [vmem:[#allocation4 + $0x5d0] sm:$0xff]
    %v327 = vld [vmem:[#allocation4 + $0x5d8] sm:$0xff]
    %v328 = vld [vmem:[#allocation4 + $0x5e0] sm:$0xff]
    %v329 = vld [vmem:[#allocation4 + $0x5e8] sm:$0xff]
    %v330 = vld [vmem:[#allocation4 + $0x5f0] sm:$0xff]
    %v331 = vld [vmem:[#allocation4 + $0x5f8] sm:$0xff]
    %v332 = vld [vmem:[%s4] sm:$0x7]
    %v334 = vperm.slane %v332, 0
    %v335 = vperm.slane %v332, 1
    %v336 = vperm.slane %v332, 2
    %340 = vmatpush.msra.mxu0 %v185
    %341 = vmatpush.msra.mxu0 %v182
    %342 = vmatpush.msra.mxu0 %v179
    %343 = vmatpush.msra.mxu0 %v176
    %344 = vmatpush.msra.mxu0 %v173
    %345 = vmatpush.msra.mxu0 %v170
    %346 = vmatpush.msra.mxu0 %v167
    %347 = vmatpush.msra.mxu0 %v164
    %348 = vmatpush.msra.mxu0 %v161
    %349 = vmatpush.msra.mxu0 %v158
    %350 = vmatpush.msra.mxu0 %v155
    %351 = vmatpush.msra.mxu0 %v152
    %352 = vmatpush.msra.mxu0 %v149
    %353 = vmatpush.msra.mxu0 %v146
    %354 = vmatpush.msra.mxu0 %v143
    %355 = vmatpush.msra.mxu0 %v140
    %356 = vmatmul.f32.gmra.mxu0 %v136
    %v357 = vpop.f32.mrf.mxu0
    %v358 = vadd.f32 %v334, %v357
    %359 = vdwg.mxu0
    %360 = vmatpush.msra.mxu0 %v233
    %361 = vmatpush.msra.mxu0 %v230
    %362 = vmatpush.msra.mxu0 %v227
    %363 = vmatpush.msra.mxu0 %v224
    %364 = vmatpush.msra.mxu0 %v221
    %365 = vmatpush.msra.mxu0 %v218
    %366 = vmatpush.msra.mxu0 %v215
    %367 = vmatpush.msra.mxu0 %v212
    %368 = vmatpush.msra.mxu0 %v209
    %369 = vmatpush.msra.mxu0 %v206
    %370 = vmatpush.msra.mxu0 %v203
    %371 = vmatpush.msra.mxu0 %v200
    %372 = vmatpush.msra.mxu0 %v197
    %373 = vmatpush.msra.mxu0 %v194
    %374 = vmatpush.msra.mxu0 %v191
    %375 = vmatpush.msra.mxu0 %v188
    %376 = vmatmul.f32.gmra.mxu0 %v137
    %v377 = vpop.f32.mrf.mxu0
    %v378 = vadd.f32 %v358, %v377
    %379 = vdwg.mxu0
    %380 = vmatpush.msra.mxu0 %v281
    %381 = vmatpush.msra.mxu0 %v278
    %382 = vmatpush.msra.mxu0 %v275
    %383 = vmatpush.msra.mxu0 %v272
    %384 = vmatpush.msra.mxu0 %v269
    %385 = vmatpush.msra.mxu0 %v266
    %386 = vmatpush.msra.mxu0 %v263
    %387 = vmatpush.msra.mxu0 %v260
    %388 = vmatpush.msra.mxu0 %v257
    %389 = vmatpush.msra.mxu0 %v254
    %390 = vmatpush.msra.mxu0 %v251
    %391 = vmatpush.msra.mxu0 %v248
    %392 = vmatpush.msra.mxu0 %v245
    %393 = vmatpush.msra.mxu0 %v242
    %394 = vmatpush.msra.mxu0 %v239
    %395 = vmatpush.msra.mxu0 %v236
    %396 = vmatmul.f32.gmra.mxu0 %v138
    %v397 = vpop.f32.mrf.mxu0
    %v398 = vadd.f32 %v378, %v397
    %399 = vdwg.mxu0
    %400 = vmatpush.msra.mxu0 %v329
    %401 = vmatpush.msra.mxu0 %v326
    %402 = vmatpush.msra.mxu0 %v323
    %403 = vmatpush.msra.mxu0 %v320
    %404 = vmatpush.msra.mxu0 %v317
    %405 = vmatpush.msra.mxu0 %v314
    %406 = vmatpush.msra.mxu0 %v311
    %407 = vmatpush.msra.mxu0 %v308
    %408 = vmatpush.msra.mxu0 %v305
    %409 = vmatpush.msra.mxu0 %v302
    %410 = vmatpush.msra.mxu0 %v299
    %411 = vmatpush.msra.mxu0 %v296
    %412 = vmatpush.msra.mxu0 %v293
    %413 = vmatpush.msra.mxu0 %v290
    %414 = vmatpush.msra.mxu0 %v287
    %415 = vmatpush.msra.mxu0 %v284
    %416 = vmatmul.f32.gmra.mxu0 %v139
    %v417 = vpop.f32.mrf.mxu0
    %v418 = vadd.f32 %v398, %v417
    %419 = vdwg.mxu0
    %420 = vmatpush.msra.mxu0 %v186
    %421 = vmatpush.msra.mxu0 %v183
    %422 = vmatpush.msra.mxu0 %v180
    %423 = vmatpush.msra.mxu0 %v177
    %424 = vmatpush.msra.mxu0 %v174
    %425 = vmatpush.msra.mxu0 %v171
    %426 = vmatpush.msra.mxu0 %v168
    %427 = vmatpush.msra.mxu0 %v165
    %428 = vmatpush.msra.mxu0 %v162
    %429 = vmatpush.msra.mxu0 %v159
    %430 = vmatpush.msra.mxu0 %v156
    %431 = vmatpush.msra.mxu0 %v153
    %432 = vmatpush.msra.mxu0 %v150
    %433 = vmatpush.msra.mxu0 %v147
    %434 = vmatpush.msra.mxu0 %v144
    %435 = vmatpush.msra.mxu0 %v141
    %436 = vmatmul.f32.gmra.mxu0 %v136
    %v437 = vpop.f32.mrf.mxu0
    %v438 = vadd.f32 %v335, %v437
    %439 = vdwg.mxu0
    %440 = vmatpush.msra.mxu0 %v234
    %441 = vmatpush.msra.mxu0 %v231
    %442 = vmatpush.msra.mxu0 %v228
    %443 = vmatpush.msra.mxu0 %v225
    %444 = vmatpush.msra.mxu0 %v222
    %445 = vmatpush.msra.mxu0 %v219
    %446 = vmatpush.msra.mxu0 %v216
    %447 = vmatpush.msra.mxu0 %v213
    %448 = vmatpush.msra.mxu0 %v210
    %449 = vmatpush.msra.mxu0 %v207
    %450 = vmatpush.msra.mxu0 %v204
    %451 = vmatpush.msra.mxu0 %v201
    %452 = vmatpush.msra.mxu0 %v198
    %453 = vmatpush.msra.mxu0 %v195
    %454 = vmatpush.msra.mxu0 %v192
    %455 = vmatpush.msra.mxu0 %v189
    %456 = vmatmul.f32.gmra.mxu0 %v137
    %v457 = vpop.f32.mrf.mxu0
    %v458 = vadd.f32 %v438, %v457
    %459 = vdwg.mxu0
    %460 = vmatpush.msra.mxu0 %v282
    %461 = vmatpush.msra.mxu0 %v279
    %462 = vmatpush.msra.mxu0 %v276
    %463 = vmatpush.msra.mxu0 %v273
    %464 = vmatpush.msra.mxu0 %v270
    %465 = vmatpush.msra.mxu0 %v267
    %466 = vmatpush.msra.mxu0 %v264
    %467 = vmatpush.msra.mxu0 %v261
    %468 = vmatpush.msra.mxu0 %v258
    %469 = vmatpush.msra.mxu0 %v255
    %470 = vmatpush.msra.mxu0 %v252
    %471 = vmatpush.msra.mxu0 %v249
    %472 = vmatpush.msra.mxu0 %v246
    %473 = vmatpush.msra.mxu0 %v243
    %474 = vmatpush.msra.mxu0 %v240
    %475 = vmatpush.msra.mxu0 %v237
    %476 = vmatmul.f32.gmra.mxu0 %v138
    %v477 = vpop.f32.mrf.mxu0
    %v478 = vadd.f32 %v458, %v477
    %479 = vdwg.mxu0
    %480 = vmatpush.msra.mxu0 %v330
    %481 = vmatpush.msra.mxu0 %v327
    %482 = vmatpush.msra.mxu0 %v324
    %483 = vmatpush.msra.mxu0 %v321
    %484 = vmatpush.msra.mxu0 %v318
    %485 = vmatpush.msra.mxu0 %v315
    %486 = vmatpush.msra.mxu0 %v312
    %487 = vmatpush.msra.mxu0 %v309
    %488 = vmatpush.msra.mxu0 %v306
    %489 = vmatpush.msra.mxu0 %v303
    %490 = vmatpush.msra.mxu0 %v300
    %491 = vmatpush.msra.mxu0 %v297
    %492 = vmatpush.msra.mxu0 %v294
    %493 = vmatpush.msra.mxu0 %v291
    %494 = vmatpush.msra.mxu0 %v288
    %495 = vmatpush.msra.mxu0 %v285
    %496 = vmatmul.f32.gmra.mxu0 %v139
    %v497 = vpop.f32.mrf.mxu0
    %v498 = vadd.f32 %v478, %v497
    %499 = vdwg.mxu0
    %500 = vmatpush.msra.mxu0 %v187
    %501 = vmatpush.msra.mxu0 %v184
    %502 = vmatpush.msra.mxu0 %v181
    %503 = vmatpush.msra.mxu0 %v178
    %504 = vmatpush.msra.mxu0 %v175
    %505 = vmatpush.msra.mxu0 %v172
    %506 = vmatpush.msra.mxu0 %v169
    %507 = vmatpush.msra.mxu0 %v166
    %508 = vmatpush.msra.mxu0 %v163
    %509 = vmatpush.msra.mxu0 %v160
    %510 = vmatpush.msra.mxu0 %v157
    %511 = vmatpush.msra.mxu0 %v154
    %512 = vmatpush.msra.mxu0 %v151
    %513 = vmatpush.msra.mxu0 %v148
    %514 = vmatpush.msra.mxu0 %v145
    %515 = vmatpush.msra.mxu0 %v142
    %516 = vmatmul.f32.gmra.mxu0 %v136
    %v517 = vpop.f32.mrf.mxu0
    %v518 = vadd.f32 %v336, %v517
    %519 = vdwg.mxu0
    %520 = vmatpush.msra.mxu0 %v235
    %521 = vmatpush.msra.mxu0 %v232
    %522 = vmatpush.msra.mxu0 %v229
    %523 = vmatpush.msra.mxu0 %v226
    %524 = vmatpush.msra.mxu0 %v223
    %525 = vmatpush.msra.mxu0 %v220
    %526 = vmatpush.msra.mxu0 %v217
    %527 = vmatpush.msra.mxu0 %v214
    %528 = vmatpush.msra.mxu0 %v211
    %529 = vmatpush.msra.mxu0 %v208
    %530 = vmatpush.msra.mxu0 %v205
    %531 = vmatpush.msra.mxu0 %v202
    %532 = vmatpush.msra.mxu0 %v199
    %533 = vmatpush.msra.mxu0 %v196
    %534 = vmatpush.msra.mxu0 %v193
    %535 = vmatpush.msra.mxu0 %v190
    %536 = vmatmul.f32.gmra.mxu0 %v137
    %v537 = vpop.f32.mrf.mxu0
    %v538 = vadd.f32 %v518, %v537
    %539 = vdwg.mxu0
    %540 = vmatpush.msra.mxu0 %v283
    %541 = vmatpush.msra.mxu0 %v280
    %542 = vmatpush.msra.mxu0 %v277
    %543 = vmatpush.msra.mxu0 %v274
    %544 = vmatpush.msra.mxu0 %v271
    %545 = vmatpush.msra.mxu0 %v268
    %546 = vmatpush.msra.mxu0 %v265
    %547 = vmatpush.msra.mxu0 %v262
    %548 = vmatpush.msra.mxu0 %v259
    %549 = vmatpush.msra.mxu0 %v256
    %550 = vmatpush.msra.mxu0 %v253
    %551 = vmatpush.msra.mxu0 %v250
    %552 = vmatpush.msra.mxu0 %v247
    %553 = vmatpush.msra.mxu0 %v244
    %554 = vmatpush.msra.mxu0 %v241
    %555 = vmatpush.msra.mxu0 %v238
    %556 = vmatmul.f32.gmra.mxu0 %v138
    %v557 = vpop.f32.mrf.mxu0
    %v558 = vadd.f32 %v538, %v557
    %559 = vdwg.mxu0
    %560 = vmatpush.msra.mxu0 %v331
    %561 = vmatpush.msra.mxu0 %v328
    %562 = vmatpush.msra.mxu0 %v325
    %563 = vmatpush.msra.mxu0 %v322
    %564 = vmatpush.msra.mxu0 %v319
    %565 = vmatpush.msra.mxu0 %v316
    %566 = vmatpush.msra.mxu0 %v313
    %567 = vmatpush.msra.mxu0 %v310
    %568 = vmatpush.msra.mxu0 %v307
    %569 = vmatpush.msra.mxu0 %v304
    %570 = vmatpush.msra.mxu0 %v301
    %571 = vmatpush.msra.mxu0 %v298
    %572 = vmatpush.msra.mxu0 %v295
    %573 = vmatpush.msra.mxu0 %v292
    %574 = vmatpush.msra.mxu0 %v289
    %575 = vmatpush.msra.mxu0 %v286
    %576 = vmatmul.f32.gmra.mxu0 %v139
    %v577 = vpop.f32.mrf.mxu0
    %v578 = vadd.f32 %v558, %v577
    %579 = vdwg.mxu0
    %v580 = vmax.f32 %v418, 0.0
    %v581 = vmax.f32 %v498, 0.0
    %v582 = vmax.f32 %v578, 0.0
    %v583 = vld [vmem:[%s5] sm:$0x7]
    %v585 = vperm.slane %v583, 0
    %v586 = vperm.slane %v583, 1
    %v587 = vperm.slane %v583, 2
    %v591 = vmul.f32 %v580, %v585
    %v592 = vmul.f32 %v581, %v586
    %v593 = vmul.f32 %v582, %v587
    %v594 = vadd.f32 %v591, %v592
    %v595 = vadd.f32 %v594, %v593
    %596 = vadd.xlane.f32.xlu0 %v595
    %v597 = vpop.xlane.xlu0 %596
    %v598 = vld [vmem:[%s6] sm:$0x1]
    %v600 = vperm.slane %v598, 0
    %v602 = vadd.f32 %v597, %v600
    %603 = vst [vmem:[%s7] sm:$0xff] %v602
    // Predicated region
    $region38: #{critic_forward.1} parent=1 // pred_check
      _
    $region39: #{critic_forward.1} parent=1 // pred_check_branch
      %605 = sbr.rel (0) target = $region41
    $region40: #{critic_forward.1} parent=1 // pred_region
      _
    $region41: #{critic_forward.1} parent=1 // pred_fallthru
      _
    // Predicated region
    $region42: #{critic_forward.1} parent=1 // pred_check
      _
    $region43: #{critic_forward.1} parent=1 // pred_check_branch
      %607 = sbr.rel (0) target = $region45
    $region44: #{critic_forward.1} parent=1 // pred_region
      _
    $region45: #{critic_forward.1} parent=1 // pred_fallthru
      _
    %608 = vsyncpa [#allocation3], 1
    %609 = vsyncpa [#allocation5], 1

</llo_original>
